<compile_context>
chip_gen: v6e
topology: v6e:2x2x1
jax: 0.10.0
libtpu: 0.0.40
codegen_flags: <defaults>
</compile_context>

<pallas_src>
import functools

import jax
import jax.numpy as jnp
from jax import lax
from jax.experimental import pallas as pl
from jax.experimental.pallas import tpu as pltpu

_ROW_CHUNK = 64  # rows per inner-loop iteration (multiple of 8 sublanes, keeps vreg-resident)


def _sepconv1d_kernel(x_ref, wl_ref, bl_ref, o_ref, *, shifts):
    """Fused depthwise+pointwise+bias+ReLU on one block of batch rows.

    x_ref : (TB, C*W)      flat input rows (native NCW layout, contiguously reshaped)
    wl_ref: (C*K, Cout*W)  per-tap fused weight lane-vectors (boundary masks folded in)
    bl_ref: (1, Cout*W)    fused bias lane-vector
    o_ref : (TB, Cout*W)   flat, lane-dense output rows
    """
    TB, CW = x_ref.shape
    T, L = wl_ref.shape
    rep = L // CW                       # Cout // C copies of the input fill the output lanes

    w_all = wl_ref[...]                 # tiny (C*K, L): stays in vregs across the row loop
    b_row = bl_ref[...]                 # (1, L)

    def compute(row_slice):
        x = x_ref[row_slice, :].astype(jnp.float32)          # (rows, C*W)
        if rep > 1:                                           # one lane-axis tile so every
            x = jnp.concatenate([x] * rep, axis=1)            # output segment sees all channels
        acc = None
        for t, s in enumerate(shifts):                        # C*K taps, fully unrolled
            xs = pltpu.roll(x, shift=s, axis=1) if s else x   # XLU lane rotate (cheap slot)
            term = xs * w_all[t:t + 1, :]                     # full-lane VPU FMA
            acc = term if acc is None else acc + term
        y = jnp.maximum(acc + b_row, 0.0)                     # fused bias + ReLU
        # TODO(synk): nn.Dropout(0.2) is identity at inference time; not applied here.
        o_ref[row_slice, :] = y.astype(o_ref.dtype)           # single unmasked lane-dense store

    n_full = TB // _ROW_CHUNK
    rem = TB % _ROW_CHUNK
    if n_full > 0:
        @pl.loop(0, n_full)
        def _(i):
            r0 = pl.multiple_of(i * _ROW_CHUNK, _ROW_CHUNK)
            compute(pl.ds(r0, _ROW_CHUNK))
    if rem > 0:
        compute(pl.ds(n_full * _ROW_CHUNK, rem))


def _round_up(n, m):
    return -(-n // m) * m


def _fused_lane_weights(dw, dwb, pw, pwb, *, W, pad):
    """Fold depthwise+pointwise weights/biases into per-tap lane-vector tables.

    Row (j*K + k) of `wl` multiplies roll(tile(x_flat), j*W + pad - k); zero-padding
    edges and channel-boundary wraparound are folded in as zeroed lanes.
    Returns (wl (C*K, Cout*W) f32, bl (1, Cout*W) f32, shifts: list of Python ints).
    """
    C, K = dw.shape
    Cout = pw.shape[0]
    L = Cout * W

    eff_w = (pw[:, :, None] * dw[None, :, :]).astype(jnp.float32)   # (Cout, C, K)
    eff_b = (pwb[:, 0] + pw @ dwb[:, 0]).astype(jnp.float32)        # (Cout,)

    lane = jnp.arange(L)
    co_of_lane = lane // W                                          # output channel per lane
    w_of_lane = lane % W                                            # output position per lane

    rows, shifts = [], []
    for j in range(C):                       # after a roll by j*W, segment co holds channel (co-j)%C
        c_of_lane = (co_of_lane - j) % C
        for k in range(K):                   # depthwise tap
            src = w_of_lane + (k - pad)
            valid = ((src >= 0) & (src < W)).astype(jnp.float32)    # zero-pad / boundary mask
            rows.append(eff_w[co_of_lane, c_of_lane, k] * valid)
            shifts.append((j * W + pad - k) % L)                    # static lane-roll amount
    wl = jnp.stack(rows, axis=0)                                    # (C*K, L)
    bl = eff_b[co_of_lane][None, :]                                 # (1, L)
    return wl, bl, shifts


def _vmem_params():
    """(block-sizing budget, scoped vmem limit) derived from the chip generation."""
    try:
        cap = int(pltpu.get_tpu_info().vmem_capacity_bytes)
    except Exception:
        cap = 64 * 1024 * 1024              # conservative default = v7x physical VMEM
    budget = max(8 << 20, cap // 4)         # ~16 MiB on v7x, ~32 MiB on v5e/v6e
    limit = max(32 << 20, min(cap // 2, 64 << 20))   # 32 MiB on v7x, 64 MiB on v5e/v6e
    return budget, limit


def _pick_block_rows(N, CW, L, vmem_budget_bytes):
    """Batch rows per grid step: double-buffered in+out blocks sized to the budget."""
    row_bytes = 4 * (2 * _round_up(CW, 128) + 2 * _round_up(L, 128))
    tb = max(1, vmem_budget_bytes // row_bytes)
    # Split the grid (v7x two-TensorCore sharing via "parallel") only when each step
    # still has substantial work; on 1-TC chips / small N a forced split just adds
    # ~0.35us per extra step and halves DMA granularity.
    if N >= 4096:
        tb = min(tb, -(-N // 2))
    if tb >= N:
        return N
    return max(_ROW_CHUNK, (tb // _ROW_CHUNK) * _ROW_CHUNK)


def _sepconv1d_jax(x, dw, dwb, pw, pwb, *, stride, pad):
    """Pure-JAX path mirroring SepConv1d_v2 (conv_type='1d', eval mode)."""
    C = x.shape[1]
    Cout = pw.shape[0]
    y = lax.conv_general_dilated(
        x, dw[:, None, :], window_strides=(stride,), padding=((pad, pad),),
        dimension_numbers=("NCH", "OIH", "NCH"), feature_group_count=C)
    y = y + dwb.reshape(1, C, 1)
    z = lax.conv_general_dilated(
        y, pw[:, :, None], window_strides=(1,), padding=((0, 0),),
        dimension_numbers=("NCH", "OIH", "NCH"))
    z = z + pwb.reshape(1, Cout, 1)
    return jnp.maximum(z, 0.0)              # ReLU; Dropout(0.2) is identity at eval


def sepconv1d_v2(x, dw, dwb, pw, pwb, *, stride, pad, block_rows=None):
    """x: (N, Cin, L) float (Conv1d NCW layout).  Returns (N, Cout, Lout).

    dw : (Cin, K)     depthwise Conv1d weight (Cin, 1, K) squeezed
    dwb: (Cin, 1)     depthwise bias
    pw : (Cout, Cin)  pointwise Conv1d weight (Cout, Cin, 1) squeezed
    pwb: (Cout, 1)    pointwise bias
    """
    N, C, W = x.shape
    Cout, K = pw.shape[0], dw.shape[1]
    Wout = (W + 2 * pad - K) // stride + 1

    # Lane-dense fast path: stride 1, "same" output length, Cout a multiple of Cin
    # (covers the instantiated module: ni=4, no=8, kernel=3, stride=1, pad=1).
    fast = (stride == 1) and (Wout == W) and (Cout % C == 0)
    if not fast:
        # TODO(synk): strided / non-"same"-padded / Cout%Cin!=0 configs use the fused
        # pure-JAX path; the Pallas kernel covers the module's instantiated config.
        return _sepconv1d_jax(x, dw, dwb, pw, pwb, stride=stride, pad=pad)

    CW = C * W
    L = Cout * W
    wl, bl, shifts = _fused_lane_weights(dw, dwb, pw, pwb, W=W, pad=pad)

    budget, vmem_limit = _vmem_params()
    tb = block_rows if block_rows is not None else _pick_block_rows(N, CW, L, budget)
    grid = (pl.cdiv(N, tb),)

    kernel = functools.partial(_sepconv1d_kernel, shifts=shifts)

    out_flat = pl.pallas_call(
        kernel,
        out_shape=jax.ShapeDtypeStruct((N, L), x.dtype),
        grid_spec=pltpu.PrefetchScalarGridSpec(
            num_scalar_prefetch=0,
            grid=grid,
            in_specs=[
                pl.BlockSpec((tb, CW), lambda i: (i, 0)),       # flat input rows
                pl.BlockSpec((C * K, L), lambda i: (0, 0)),     # fused lane weights (resident)
                pl.BlockSpec((1, L), lambda i: (0, 0)),         # fused bias lanes (resident)
            ],
            out_specs=pl.BlockSpec((tb, L), lambda i: (i, 0)),  # lane-dense flat output
        ),
        compiler_params=pltpu.CompilerParams(
            dimension_semantics=("parallel",),
            vmem_limit_bytes=vmem_limit,
        ),
    )(x.reshape(N, CW), wl, bl)   # contiguous (free) reshape to the flat NCW layout

    # Contiguous (free) reshape back to the PyTorch output layout (N, Cout, Lout).
    return out_flat.reshape(N, Cout, Wout)


if __name__ == "__main__":
    # Module config: SepConv1d_v2(ni=4, no=8, kernel=3, stride=1, pad=1), eval mode.
    Cin, Cout, K, STRIDE, PAD = 4, 8, 3, 1, 1

    key = jax.random.PRNGKey(0)
    kx, k1, k2, k3, k4, kx2 = jax.random.split(key, 6)

    # Deterministic synthetic parameters (shapes match the nn.Conv1d layers).
    dw = 0.1 * jax.random.normal(k1, (Cin, K), dtype=jnp.float32)      # depthwise (Cin,1,K) squeezed
    dwb = 0.1 * jax.random.normal(k2, (Cin, 1), dtype=jnp.float32)
    pw = 0.1 * jax.random.normal(k3, (Cout, Cin), dtype=jnp.float32)   # pointwise (Cout,Cin,1) squeezed
    pwb = 0.1 * jax.random.normal(k4, (Cout, 1), dtype=jnp.float32)

    # Primary config: single grid step, single row chunk.
    N, L_in = 16, 16
    x = jax.random.normal(kx, (N, Cin, L_in), dtype=jnp.float32)
    out = jax.block_until_ready(sepconv1d_v2(x, dw, dwb, pw, pwb, stride=STRIDE, pad=PAD))
    ref = _sepconv1d_jax(x, dw, dwb, pw, pwb, stride=STRIDE, pad=PAD)
    assert out.shape == ref.shape, (out.shape, ref.shape)
    assert jnp.allclose(out, ref, atol=1e-5, rtol=1e-5), "mismatch vs reference (N=16)"

    # Secondary config: non-divisible N, multi-step grid, multi-chunk inner row loop.
    N2 = 200
    x2 = jax.random.normal(kx2, (N2, Cin, L_in), dtype=jnp.float32)
    out2 = jax.block_until_ready(
        sepconv1d_v2(x2, dw, dwb, pw, pwb, stride=STRIDE, pad=PAD, block_rows=128))
    ref2 = _sepconv1d_jax(x2, dw, dwb, pw, pwb, stride=STRIDE, pad=PAD)
    assert out2.shape == ref2.shape, (out2.shape, ref2.shape)
    assert jnp.allclose(out2, ref2, atol=1e-5, rtol=1e-5), "mismatch vs reference (N=200)"

    print("KERNEL_OK")
</pallas_src>

<mosaic_0001>
module attributes {stable_mosaic.version = 11 : i64} {
  func.func @_sepconv1d_kernel(%arg0: i32, %arg1: memref<16x64xf32, #tpu.memory_space<vmem>>, %arg2: memref<12x128xf32, #tpu.memory_space<vmem>>, %arg3: memref<1x128xf32, #tpu.memory_space<vmem>>, %arg4: memref<16x128xf32, #tpu.memory_space<vmem>>) attributes {dimension_semantics = [#tpu.dimension_semantics<parallel>], iteration_bounds = array<i64: 1>, scalar_prefetch = 0 : i64, scratch_operands = 0 : i64, tpu.core_type = #tpu.core_type<tc>, window_params = [{transform_indices = @transform_0, window_bounds = array<i64: 16, 64>}, {pipeline_mode = #tpu.pipeline_mode<synchronous>, transform_indices = @transform_1, window_bounds = array<i64: 12, 128>}, {pipeline_mode = #tpu.pipeline_mode<synchronous>, transform_indices = @transform_2, window_bounds = array<i64: 1, 128>}, {transform_indices = @transform_3, window_bounds = array<i64: 16, 128>}]} {
    %c0 = arith.constant 0 : index
    %c0_0 = arith.constant 0 : index
    %0 = vector.load %arg2[%c0, %c0_0] : memref<12x128xf32, #tpu.memory_space<vmem>>, vector<12x128xf32>
    %c0_1 = arith.constant 0 : index
    %c0_2 = arith.constant 0 : index
    %1 = vector.load %arg3[%c0_1, %c0_2] : memref<1x128xf32, #tpu.memory_space<vmem>>, vector<1x128xf32>
    %c0_3 = arith.constant 0 : index
    %c0_4 = arith.constant 0 : index
    %2 = vector.load %arg1[%c0_3, %c0_4] : memref<16x64xf32, #tpu.memory_space<vmem>>, vector<16x64xf32>
    %3 = tpu.concatenate %2, %2 in 1 : vector<16x64xf32>, vector<16x64xf32> -> vector<16x128xf32>
    %c1_i32 = arith.constant 1 : i32
    %4 = tpu.dynamic_rotate %3 by %c1_i32 dim 1 : vector<16x128xf32>, i32 -> vector<16x128xf32>
    %5 = vector.extract_strided_slice %0 {offsets = [0, 0], sizes = [1, 128], strides = [1, 1]} : vector<12x128xf32> to vector<1x128xf32>
    %6 = vector.broadcast %5 : vector<1x128xf32> to vector<16x128xf32>
    %7 = arith.mulf %4, %6 : vector<16x128xf32>
    %8 = vector.extract_strided_slice %0 {offsets = [1, 0], sizes = [1, 128], strides = [1, 1]} : vector<12x128xf32> to vector<1x128xf32>
    %9 = vector.broadcast %8 : vector<1x128xf32> to vector<16x128xf32>
    %10 = arith.mulf %3, %9 : vector<16x128xf32>
    %11 = arith.addf %7, %10 : vector<16x128xf32>
    %c127_i32 = arith.constant 127 : i32
    %12 = tpu.dynamic_rotate %3 by %c127_i32 dim 1 : vector<16x128xf32>, i32 -> vector<16x128xf32>
    %13 = vector.extract_strided_slice %0 {offsets = [2, 0], sizes = [1, 128], strides = [1, 1]} : vector<12x128xf32> to vector<1x128xf32>
    %14 = vector.broadcast %13 : vector<1x128xf32> to vector<16x128xf32>
    %15 = arith.mulf %12, %14 : vector<16x128xf32>
    %16 = arith.addf %11, %15 : vector<16x128xf32>
    %c17_i32 = arith.constant 17 : i32
    %17 = tpu.dynamic_rotate %3 by %c17_i32 dim 1 : vector<16x128xf32>, i32 -> vector<16x128xf32>
    %18 = vector.extract_strided_slice %0 {offsets = [3, 0], sizes = [1, 128], strides = [1, 1]} : vector<12x128xf32> to vector<1x128xf32>
    %19 = vector.broadcast %18 : vector<1x128xf32> to vector<16x128xf32>
    %20 = arith.mulf %17, %19 : vector<16x128xf32>
    %21 = arith.addf %16, %20 : vector<16x128xf32>
    %c16_i32 = arith.constant 16 : i32
    %22 = tpu.dynamic_rotate %3 by %c16_i32 dim 1 : vector<16x128xf32>, i32 -> vector<16x128xf32>
    %23 = vector.extract_strided_slice %0 {offsets = [4, 0], sizes = [1, 128], strides = [1, 1]} : vector<12x128xf32> to vector<1x128xf32>
    %24 = vector.broadcast %23 : vector<1x128xf32> to vector<16x128xf32>
    %25 = arith.mulf %22, %24 : vector<16x128xf32>
    %26 = arith.addf %21, %25 : vector<16x128xf32>
    %c15_i32 = arith.constant 15 : i32
    %27 = tpu.dynamic_rotate %3 by %c15_i32 dim 1 : vector<16x128xf32>, i32 -> vector<16x128xf32>
    %28 = vector.extract_strided_slice %0 {offsets = [5, 0], sizes = [1, 128], strides = [1, 1]} : vector<12x128xf32> to vector<1x128xf32>
    %29 = vector.broadcast %28 : vector<1x128xf32> to vector<16x128xf32>
    %30 = arith.mulf %27, %29 : vector<16x128xf32>
    %31 = arith.addf %26, %30 : vector<16x128xf32>
    %c33_i32 = arith.constant 33 : i32
    %32 = tpu.dynamic_rotate %3 by %c33_i32 dim 1 : vector<16x128xf32>, i32 -> vector<16x128xf32>
    %33 = vector.extract_strided_slice %0 {offsets = [6, 0], sizes = [1, 128], strides = [1, 1]} : vector<12x128xf32> to vector<1x128xf32>
    %34 = vector.broadcast %33 : vector<1x128xf32> to vector<16x128xf32>
    %35 = arith.mulf %32, %34 : vector<16x128xf32>
    %36 = arith.addf %31, %35 : vector<16x128xf32>
    %c32_i32 = arith.constant 32 : i32
    %37 = tpu.dynamic_rotate %3 by %c32_i32 dim 1 : vector<16x128xf32>, i32 -> vector<16x128xf32>
    %38 = vector.extract_strided_slice %0 {offsets = [7, 0], sizes = [1, 128], strides = [1, 1]} : vector<12x128xf32> to vector<1x128xf32>
    %39 = vector.broadcast %38 : vector<1x128xf32> to vector<16x128xf32>
    %40 = arith.mulf %37, %39 : vector<16x128xf32>
    %41 = arith.addf %36, %40 : vector<16x128xf32>
    %c31_i32 = arith.constant 31 : i32
    %42 = tpu.dynamic_rotate %3 by %c31_i32 dim 1 : vector<16x128xf32>, i32 -> vector<16x128xf32>
    %43 = vector.extract_strided_slice %0 {offsets = [8, 0], sizes = [1, 128], strides = [1, 1]} : vector<12x128xf32> to vector<1x128xf32>
    %44 = vector.broadcast %43 : vector<1x128xf32> to vector<16x128xf32>
    %45 = arith.mulf %42, %44 : vector<16x128xf32>
    %46 = arith.addf %41, %45 : vector<16x128xf32>
    %c49_i32 = arith.constant 49 : i32
    %47 = tpu.dynamic_rotate %3 by %c49_i32 dim 1 : vector<16x128xf32>, i32 -> vector<16x128xf32>
    %48 = vector.extract_strided_slice %0 {offsets = [9, 0], sizes = [1, 128], strides = [1, 1]} : vector<12x128xf32> to vector<1x128xf32>
    %49 = vector.broadcast %48 : vector<1x128xf32> to vector<16x128xf32>
    %50 = arith.mulf %47, %49 : vector<16x128xf32>
    %51 = arith.addf %46, %50 : vector<16x128xf32>
    %c48_i32 = arith.constant 48 : i32
    %52 = tpu.dynamic_rotate %3 by %c48_i32 dim 1 : vector<16x128xf32>, i32 -> vector<16x128xf32>
    %53 = vector.extract_strided_slice %0 {offsets = [10, 0], sizes = [1, 128], strides = [1, 1]} : vector<12x128xf32> to vector<1x128xf32>
    %54 = vector.broadcast %53 : vector<1x128xf32> to vector<16x128xf32>
    %55 = arith.mulf %52, %54 : vector<16x128xf32>
    %56 = arith.addf %51, %55 : vector<16x128xf32>
    %c47_i32 = arith.constant 47 : i32
    %57 = tpu.dynamic_rotate %3 by %c47_i32 dim 1 : vector<16x128xf32>, i32 -> vector<16x128xf32>
    %58 = vector.extract_strided_slice %0 {offsets = [11, 0], sizes = [1, 128], strides = [1, 1]} : vector<12x128xf32> to vector<1x128xf32>
    %59 = vector.broadcast %58 : vector<1x128xf32> to vector<16x128xf32>
    %60 = arith.mulf %57, %59 : vector<16x128xf32>
    %61 = arith.addf %56, %60 : vector<16x128xf32>
    %62 = vector.broadcast %1 : vector<1x128xf32> to vector<16x128xf32>
    %63 = arith.addf %61, %62 : vector<16x128xf32>
    %cst = arith.constant 0.000000e+00 : f32
    %64 = vector.broadcast %cst : f32 to vector<16x128xf32>
    %65 = arith.maximumf %63, %64 : vector<16x128xf32>
    %c0_5 = arith.constant 0 : index
    %c0_6 = arith.constant 0 : index
    %66 = vector.load %arg4[%c0_5, %c0_6] : memref<16x128xf32, #tpu.memory_space<vmem>>, vector<16x128xf32>
    tpu.vector_store %arg4[%c0_5, %c0_6], %65 {strides = array<i32>} : memref<16x128xf32, #tpu.memory_space<vmem>>, vector<16x128xf32>,
    return
  }
  func.func @transform_0(%arg0: i32) -> (i32, i32) {
    %c0_i32 = arith.constant 0 : i32
    %c0_i32_0 = arith.constant 0 : i32
    return %arg0, %c0_i32 : i32, i32
  }
  func.func @transform_1(%arg0: i32) -> (i32, i32) {
    %c0_i32 = arith.constant 0 : i32
    %c0_i32_0 = arith.constant 0 : i32
    %c0_i32_1 = arith.constant 0 : i32
    return %c0_i32, %c0_i32_0 : i32, i32
  }
  func.func @transform_2(%arg0: i32) -> (i32, i32) {
    %c0_i32 = arith.constant 0 : i32
    %c0_i32_0 = arith.constant 0 : i32
    %c0_i32_1 = arith.constant 0 : i32
    return %c0_i32, %c0_i32_0 : i32, i32
  }
  func.func @transform_3(%arg0: i32) -> (i32, i32) {
    %c0_i32 = arith.constant 0 : i32
    %c0_i32_0 = arith.constant 0 : i32
    return %arg0, %c0_i32 : i32, i32
  }
}

</mosaic_0001>

<llo_original>
// kernel: tpu_custom_call.1
$region0: #{tpu_custom_call.1}
  #allocation0 [shape = 'u32[]', space=smem, size = 0x4, offset = 0x4, fixed_abs, tag = 'smem constant byte address 0x4 - core index']
  #allocation1 [shape = 'u32[144,128]{1,0:T(1,128)}', space=vmem, size = 0x12000, scoped, tag = 'internal scratch']
  %s0 = inlined_call_operand.hbm [shape: f32[16,64], index: 0, kind: input, shape index: {}]
  %s1 = inlined_call_operand.hbm [shape: f32[12,128], index: 1, kind: input, shape index: {}]
  %s2 = inlined_call_operand.vmem [shape: f32[1,128], index: 2, kind: input, shape index: {}]
  %s3 = inlined_call_operand.hbm [shape: f32[16,128], index: 3, kind: output, shape index: {}]
  %s4 = sld [smem:[#allocation0]]
  $region30: #{tpu_custom_call.1} parent=0
    _
  %s6 = ssub.s32 1, %s4
  %s7 = scalar_select 0, %s6, %s4
  $region1: #{tpu_custom_call.1} parent=0
    #allocation2 [shape = 'u8[8192]{0}', space=vmem, size = 0x2000, scoped, tag = 'input window, operand 0, single buffered']
    #allocation3 [shape = 's32[1]{0}', space=sflag, size = 0x4, scoped, tag = 'scoped memory for tpu_custom_call.1']
    #allocation4 [shape = 's32[1]{0}', space=sflag, size = 0x4, scoped, tag = 'scoped memory for tpu_custom_call.1']
    #allocation5 [shape = 'u8[8192]{0}', space=vmem, size = 0x2000, scoped, tag = 'input window, operand 1, single buffered']
    #allocation6 [shape = 's32[1]{0}', space=sflag, size = 0x4, scoped, tag = 'scoped memory for tpu_custom_call.1']
    #allocation7 [shape = 'u8[8192]{0}', space=vmem, size = 0x2000, scoped, tag = 'output window, operand 0, single buffered']
    %8 = vsyncpa [#allocation3], 0
    %9 = vsyncpa [#allocation6], 0
    %10 = vsyncpa [#allocation4], 0
    // Predicated region
    $region2: #{tpu_custom_call.1} parent=1 // pred_check
      _
    $region3: #{tpu_custom_call.1} parent=1 // pred_check_branch
      %12 = sbr.rel (0) target = $region5
    $region4: #{tpu_custom_call.1} parent=1 // pred_region
      %s14 = ssub.s32 256, 256
      %15 = vsyncadd [#allocation3], %s14
      %s16 = sshll.u32 [#allocation2], 4
      %s17 = int_to_ptr.vmem [resolvable:$true] %s16
      %22 = dma.hbm_to_vmem [thread:$0]  %s0, 256, %s17, [#allocation3], 128, 128, 8
    $region5: #{tpu_custom_call.1} parent=1 // pred_fallthru
      _
    // Predicated region
    $region6: #{tpu_custom_call.1} parent=1 // pred_check
      _
    $region7: #{tpu_custom_call.1} parent=1 // pred_check_branch
      %24 = sbr.rel (0) target = $region9
    $region8: #{tpu_custom_call.1} parent=1 // pred_region
      %s26 = ssub.s32 256, 256
      %27 = vsyncadd [#allocation6], %s26
      %s28 = sshll.u32 [#allocation5], 4
      %s29 = int_to_ptr.vmem [resolvable:$true] %s28
      %34 = dma.hbm_to_vmem [thread:$0]  %s1, 256, %s29, [#allocation6], 128, 128, 8
    $region9: #{tpu_custom_call.1} parent=1 // pred_fallthru
      _
    // Predicated region
    $region10: #{tpu_custom_call.1} parent=1 // pred_check
      _
    $region11: #{tpu_custom_call.1} parent=1 // pred_check_branch
      %36 = sbr.rel (0) target = $region13
    $region12: #{tpu_custom_call.1} parent=1 // pred_region
      _
    $region13: #{tpu_custom_call.1} parent=1 // pred_fallthru
      _
    // Predicated region
    $region14: #{tpu_custom_call.1} parent=1 // pred_check
      _
    $region15: #{tpu_custom_call.1} parent=1 // pred_check_branch
      %38 = sbr.rel (0) target = $region17
    $region16: #{tpu_custom_call.1} parent=1 // pred_region
      %39 = dma.done [#allocation3], 256
    $region17: #{tpu_custom_call.1} parent=1 // pred_fallthru
      _
    // Predicated region
    $region18: #{tpu_custom_call.1} parent=1 // pred_check
      _
    $region19: #{tpu_custom_call.1} parent=1 // pred_check_branch
      %41 = sbr.rel (0) target = $region21
    $region20: #{tpu_custom_call.1} parent=1 // pred_region
      %42 = dma.done [#allocation6], 256
    $region21: #{tpu_custom_call.1} parent=1 // pred_fallthru
      _
    %v43 = vld [vmem:[#allocation5] sm:$0xff]
    %v44 = vld [vmem:[#allocation5 + $0x8] sm:$0xf]
    %v45 = vld [vmem:[%s2] sm:$0x1]
    %v46 = vld [vmem:[#allocation2] sm:$0xff]
    %v47 = vld [vmem:[#allocation2 + $0x8] sm:$0xff]
    %50 = vrot.lane.b32.xlu0 %v46, 64
    %v51 = vpop.permute.xlu0 %50
    %52 = vrot.lane.b32.xlu0 %v47, 64
    %v53 = vpop.permute.xlu0 %52
    %vm56 = vcmask 523264
    %v57 = vsel %vm56, %v46, %v51
    %v58 = vsel %vm56, %v47, %v53
    %59 = vrot.lane.b32.xlu0 %v57, 1
    %v60 = vpop.permute.xlu0 %59
    %61 = vrot.lane.b32.xlu0 %v58, 1
    %v62 = vpop.permute.xlu0 %61
    %v63 = vlaneseq
    %v64 = vshrl.u32 %v63, 7
    %v65 = vsub.s32 0, %v64
    %v66 = vrot.slane %v43, %v65
    %v67 = vmul.f32 %v60, %v66
    %v68 = vmul.f32 %v62, %v66
    %v69 = vlaneseq
    %v70 = vshrl.u32 %v69, 7
    %v71 = vsub.s32 1, %v70
    %v72 = vrot.slane %v43, %v71
    %v73 = vmul.f32 %v57, %v72
    %v74 = vmul.f32 %v58, %v72
    %v75 = vadd.f32 %v67, %v73
    %v76 = vadd.f32 %v68, %v74
    %77 = vrot.lane.b32.xlu0 %v57, 127
    %v78 = vpop.permute.xlu0 %77
    %79 = vrot.lane.b32.xlu0 %v58, 127
    %v80 = vpop.permute.xlu0 %79
    %v81 = vlaneseq
    %v82 = vshrl.u32 %v81, 7
    %v83 = vsub.s32 2, %v82
    %v84 = vrot.slane %v43, %v83
    %v85 = vmul.f32 %v78, %v84
    %v86 = vmul.f32 %v80, %v84
    %v87 = vadd.f32 %v75, %v85
    %v88 = vadd.f32 %v76, %v86
    %89 = vrot.lane.b32.xlu0 %v57, 17
    %v90 = vpop.permute.xlu0 %89
    %91 = vrot.lane.b32.xlu0 %v58, 17
    %v92 = vpop.permute.xlu0 %91
    %v93 = vlaneseq
    %v94 = vshrl.u32 %v93, 7
    %v95 = vsub.s32 3, %v94
    %v96 = vrot.slane %v43, %v95
    %v97 = vmul.f32 %v90, %v96
    %v98 = vmul.f32 %v92, %v96
    %v99 = vadd.f32 %v87, %v97
    %v100 = vadd.f32 %v88, %v98
    %101 = vrot.lane.b32.xlu0 %v57, 16
    %v102 = vpop.permute.xlu0 %101
    %103 = vrot.lane.b32.xlu0 %v58, 16
    %v104 = vpop.permute.xlu0 %103
    %v105 = vlaneseq
    %v106 = vshrl.u32 %v105, 7
    %v107 = vsub.s32 4, %v106
    %v108 = vrot.slane %v43, %v107
    %v109 = vmul.f32 %v102, %v108
    %v110 = vmul.f32 %v104, %v108
    %v111 = vadd.f32 %v99, %v109
    %v112 = vadd.f32 %v100, %v110
    %113 = vrot.lane.b32.xlu0 %v57, 15
    %v114 = vpop.permute.xlu0 %113
    %115 = vrot.lane.b32.xlu0 %v58, 15
    %v116 = vpop.permute.xlu0 %115
    %v117 = vlaneseq
    %v118 = vshrl.u32 %v117, 7
    %v119 = vsub.s32 5, %v118
    %v120 = vrot.slane %v43, %v119
    %v121 = vmul.f32 %v114, %v120
    %v122 = vmul.f32 %v116, %v120
    %v123 = vadd.f32 %v111, %v121
    %v124 = vadd.f32 %v112, %v122
    %125 = vrot.lane.b32.xlu0 %v57, 33
    %v126 = vpop.permute.xlu0 %125
    %127 = vrot.lane.b32.xlu0 %v58, 33
    %v128 = vpop.permute.xlu0 %127
    %v129 = vlaneseq
    %v130 = vshrl.u32 %v129, 7
    %v131 = vsub.s32 6, %v130
    %v132 = vrot.slane %v43, %v131
    %v133 = vmul.f32 %v126, %v132
    %v134 = vmul.f32 %v128, %v132
    %v135 = vadd.f32 %v123, %v133
    %v136 = vadd.f32 %v124, %v134
    %137 = vrot.lane.b32.xlu0 %v57, 32
    %v138 = vpop.permute.xlu0 %137
    %139 = vrot.lane.b32.xlu0 %v58, 32
    %v140 = vpop.permute.xlu0 %139
    %v141 = vlaneseq
    %v142 = vshrl.u32 %v141, 7
    %v143 = vsub.s32 7, %v142
    %v144 = vrot.slane %v43, %v143
    %v145 = vmul.f32 %v138, %v144
    %v146 = vmul.f32 %v140, %v144
    %v147 = vadd.f32 %v135, %v145
    %v148 = vadd.f32 %v136, %v146
    %149 = vrot.lane.b32.xlu0 %v57, 31
    %v150 = vpop.permute.xlu0 %149
    %151 = vrot.lane.b32.xlu0 %v58, 31
    %v152 = vpop.permute.xlu0 %151
    %v153 = vlaneseq
    %v154 = vshrl.u32 %v153, 7
    %v155 = vsub.s32 0, %v154
    %v156 = vrot.slane %v44, %v155
    %v157 = vmul.f32 %v150, %v156
    %v158 = vmul.f32 %v152, %v156
    %v159 = vadd.f32 %v147, %v157
    %v160 = vadd.f32 %v148, %v158
    %161 = vrot.lane.b32.xlu0 %v57, 49
    %v162 = vpop.permute.xlu0 %161
    %163 = vrot.lane.b32.xlu0 %v58, 49
    %v164 = vpop.permute.xlu0 %163
    %v165 = vlaneseq
    %v166 = vshrl.u32 %v165, 7
    %v167 = vsub.s32 1, %v166
    %v168 = vrot.slane %v44, %v167
    %v169 = vmul.f32 %v162, %v168
    %v170 = vmul.f32 %v164, %v168
    %v171 = vadd.f32 %v159, %v169
    %v172 = vadd.f32 %v160, %v170
    %173 = vrot.lane.b32.xlu0 %v57, 48
    %v174 = vpop.permute.xlu0 %173
    %175 = vrot.lane.b32.xlu0 %v58, 48
    %v176 = vpop.permute.xlu0 %175
    %v177 = vlaneseq
    %v178 = vshrl.u32 %v177, 7
    %v179 = vsub.s32 2, %v178
    %v180 = vrot.slane %v44, %v179
    %v181 = vmul.f32 %v174, %v180
    %v182 = vmul.f32 %v176, %v180
    %v183 = vadd.f32 %v171, %v181
    %v184 = vadd.f32 %v172, %v182
    %185 = vrot.lane.b32.xlu0 %v57, 47
    %v186 = vpop.permute.xlu0 %185
    %187 = vrot.lane.b32.xlu0 %v58, 47
    %v188 = vpop.permute.xlu0 %187
    %v189 = vlaneseq
    %v190 = vshrl.u32 %v189, 7
    %v191 = vsub.s32 3, %v190
    %v192 = vrot.slane %v44, %v191
    %v193 = vmul.f32 %v186, %v192
    %v194 = vmul.f32 %v188, %v192
    %v195 = vadd.f32 %v183, %v193
    %v196 = vadd.f32 %v184, %v194
    %v198 = vlaneseq
    %v199 = vshrl.u32 %v198, 7
    %v200 = vsub.s32 0, %v199
    %v201 = vrot.slane %v45, %v200
    %v203 = vadd.f32 %v195, %v201
    %v204 = vadd.f32 %v196, %v201
    %v205 = vmax.f32 %v203, 0.0
    %v206 = vmax.f32 %v204, 0.0
    %207 = vst [vmem:[#allocation7] sm:$0xff] %v205
    %208 = vst [vmem:[#allocation7 + $0x8] sm:$0xff] %v206
    // Predicated region
    $region22: #{tpu_custom_call.1} parent=1 // pred_check
      _
    $region23: #{tpu_custom_call.1} parent=1 // pred_check_branch
      %210 = sbr.rel (0) target = $region25
    $region24: #{tpu_custom_call.1} parent=1 // pred_region
      %s212 = ssub.s32 256, 256
      %213 = vsyncadd [#allocation4], %s212
      %s214 = sshll.u32 [#allocation7], 4
      %s215 = int_to_ptr.vmem [resolvable:$true] %s214
      %220 = dma.vmem_to_hbm [thread:$0]  %s215, 256, %s3, [#allocation4], 128, 128, 8
    $region25: #{tpu_custom_call.1} parent=1 // pred_fallthru
      _
    // Predicated region
    $region26: #{tpu_custom_call.1} parent=1 // pred_check
      _
    $region27: #{tpu_custom_call.1} parent=1 // pred_check_branch
      %222 = sbr.rel (0) target = $region29
    $region28: #{tpu_custom_call.1} parent=1 // pred_region
      %223 = dma.done [#allocation4], 256
    $region29: #{tpu_custom_call.1} parent=1 // pred_fallthru
      _
    %224 = vsyncpa [#allocation3], 1
    %225 = vsyncpa [#allocation6], 1
    %226 = vsyncpa [#allocation4], 1

</llo_original>
